<compile_context>
chip_gen: v6e
topology: v6e:2x2x1
jax: 0.10.0
libtpu: 0.0.40
codegen_flags: <defaults>
</compile_context>

<pallas_src>
import jax
import jax.numpy as jnp
from jax.experimental import pallas as pl
from jax.experimental.pallas import tpu as pltpu


def _bias_add_kernel(x_ref, b_ref, o_ref):
    # x_ref: (TR, THW), b_ref: (TR, 1) -> broadcast add across the lane axis.
    o_ref[...] = (x_ref[...] + b_ref[...]).astype(o_ref.dtype)


def _round_up(v: int, m: int) -> int:
    return ((v + m - 1) // m) * m


def bias_add(x: jax.Array, bias: jax.Array) -> jax.Array:
    """x: (N, C, H, W), bias: (C,) -> x + bias[None, :, None, None]."""
    N, C, H, W = x.shape
    assert bias.shape == (C,)

    hw = H * W
    rows = N * C

    out_dtype = jnp.promote_types(x.dtype, bias.dtype)

    # Free view: NCHW memory order kept, contiguous spatial dim -> lane axis.
    x2d = x.reshape(rows, hw)
    # Tiny (N*C, 1) bias (N*C*itemsize bytes total), stays VMEM-resident per
    # row block across the spatial grid axis.
    b2d = jnp.tile(bias.astype(out_dtype), N).reshape(rows, 1)

    x_itemsize = jnp.dtype(x.dtype).itemsize
    out_itemsize = jnp.dtype(out_dtype).itemsize
    itemsize = max(x_itemsize, out_itemsize)
    sublane = {4: 8, 2: 16, 1: 32}.get(x_itemsize, 8)
    LANE = 128

    # ~2 MiB per block: with double-buffered input + output (+ tiny bias) that
    # is ~8 MiB of VMEM - safe on v5e (16 MiB scoped default) and leaves large
    # headroom on v6e/v7x.  (Could be raised to ~4 MiB on v6e only.)
    target_bytes = 2 << 20

    # Lane tile: multiple of 128, full H*W rows when they fit the budget
    # (contiguous DMA), otherwise split.  Never exceeds the byte budget.
    max_lane_units = max(LANE, (target_bytes // (sublane * itemsize)) // LANE * LANE)
    thw = min(_round_up(hw, LANE), max_lane_units)

    # Row tile: multiple of the sublane quantum, sized from remaining budget.
    rows_budget = max(sublane, (target_bytes // (thw * itemsize)) // sublane * sublane)
    tr = min(_round_up(rows, sublane), rows_budget)

    grid = (pl.cdiv(rows, tr), pl.cdiv(hw, thw))  # edge blocks masked by Pallas

    # Explicit VMEM budget: double-buffered x + out blocks + bias, plus slack.
    block_bytes = tr * thw
    vmem_need = 2 * block_bytes * x_itemsize + 2 * block_bytes * out_itemsize \
        + 2 * tr * out_itemsize
    vmem_limit = min(max(vmem_need + (4 << 20), 16 << 20), 32 << 20)

    out2d = pl.pallas_call(
        _bias_add_kernel,
        out_shape=jax.ShapeDtypeStruct((rows, hw), out_dtype),
        grid_spec=pltpu.PrefetchScalarGridSpec(
            num_scalar_prefetch=0,
            grid=grid,
            in_specs=[
                pl.BlockSpec((tr, thw), lambda r, s: (r, s)),
                # Bias block depends only on the row-block index -> resident
                # in VMEM across the fastest (spatial) grid axis.
                pl.BlockSpec((tr, 1), lambda r, s: (r, 0)),
            ],
            out_specs=pl.BlockSpec((tr, thw), lambda r, s: (r, s)),
        ),
        compiler_params=pltpu.CompilerParams(
            # Both grid axes fully independent -> megacore-shardable on v7x;
            # no-op on single-TC v5e/v6e.
            dimension_semantics=("parallel", "parallel"),
            vmem_limit_bytes=vmem_limit,
        ),
    )(x2d, b2d)

    return out2d.reshape(N, C, H, W)


if __name__ == "__main__":
    # Deterministic synthetic parameters / inputs (shapes match the module).
    N, C, H, W = 2, 4, 16, 16
    key = jax.random.PRNGKey(0)
    kx, kb = jax.random.split(key)

    x = jax.random.normal(kx, (N, C, H, W), dtype=jnp.float32)
    bias = jax.random.normal(kb, (C,), dtype=jnp.float32)  # nn.Parameter(num_features)

    out = bias_add(x, bias)
    out = jax.block_until_ready(out)

    # Reference check against plain JAX broadcasting (same semantics as torch).
    ref = x + bias.reshape(1, C, 1, 1)
    assert out.shape == (N, C, H, W)
    assert jnp.allclose(out, ref, atol=1e-6, rtol=1e-6)

    print("KERNEL_OK")
</pallas_src>

<mosaic_0001>
module attributes {stable_mosaic.version = 11 : i64} {
  func.func @_bias_add_kernel(%arg0: i32, %arg1: i32, %arg2: memref<8x256xf32, #tpu.memory_space<vmem>>, %arg3: memref<8x1xf32, #tpu.memory_space<vmem>>, %arg4: memref<8x256xf32, #tpu.memory_space<vmem>>) attributes {dimension_semantics = [#tpu.dimension_semantics<parallel>, #tpu.dimension_semantics<parallel>], iteration_bounds = array<i64: 1, 1>, scalar_prefetch = 0 : i64, scratch_operands = 0 : i64, tpu.core_type = #tpu.core_type<tc>, window_params = [{transform_indices = @transform_0, window_bounds = array<i64: 8, 256>}, {transform_indices = @transform_1, window_bounds = array<i64: 8, 1>}, {transform_indices = @transform_2, window_bounds = array<i64: 8, 256>}]} {
    %c0 = arith.constant 0 : index
    %c0_0 = arith.constant 0 : index
    %0 = vector.load %arg2[%c0, %c0_0] : memref<8x256xf32, #tpu.memory_space<vmem>>, vector<8x256xf32>
    %c0_1 = arith.constant 0 : index
    %c0_2 = arith.constant 0 : index
    %1 = vector.load %arg3[%c0_1, %c0_2] : memref<8x1xf32, #tpu.memory_space<vmem>>, vector<8x1xf32>
    %2 = vector.broadcast %1 : vector<8x1xf32> to vector<8x256xf32>
    %3 = arith.addf %0, %2 : vector<8x256xf32>
    %c0_3 = arith.constant 0 : index
    %c0_4 = arith.constant 0 : index
    %4 = vector.load %arg4[%c0_3, %c0_4] : memref<8x256xf32, #tpu.memory_space<vmem>>, vector<8x256xf32>
    tpu.vector_store %arg4[%c0_3, %c0_4], %3 {strides = array<i32>} : memref<8x256xf32, #tpu.memory_space<vmem>>, vector<8x256xf32>,
    return
  }
  func.func @transform_0(%arg0: i32, %arg1: i32) -> (i32, i32) {
    %c0_i32 = arith.constant 0 : i32
    return %arg0, %arg1 : i32, i32
  }
  func.func @transform_1(%arg0: i32, %arg1: i32) -> (i32, i32) {
    %c0_i32 = arith.constant 0 : i32
    %c0_i32_0 = arith.constant 0 : i32
    return %arg0, %c0_i32 : i32, i32
  }
  func.func @transform_2(%arg0: i32, %arg1: i32) -> (i32, i32) {
    %c0_i32 = arith.constant 0 : i32
    return %arg0, %arg1 : i32, i32
  }
}

</mosaic_0001>

<llo_original>
// kernel: tpu_custom_call.1
$region0: #{tpu_custom_call.1}
  #allocation0 [shape = 'u32[]', space=smem, size = 0x4, offset = 0x4, fixed_abs, tag = 'smem constant byte address 0x4 - core index']
  #allocation1 [shape = 'u32[144,128]{1,0:T(1,128)}', space=vmem, size = 0x12000, scoped, tag = 'internal scratch']
  %s0 = inlined_call_operand.hbm [shape: f32[8,256], index: 0, kind: input, shape index: {}]
  %s1 = inlined_call_operand.vmem [shape: f32[8,1], index: 1, kind: input, shape index: {}]
  %s2 = inlined_call_operand.hbm [shape: f32[8,256], index: 2, kind: output, shape index: {}]
  %s3 = sld [smem:[#allocation0]]
  $region22: #{tpu_custom_call.1} parent=0
    _
  %s5 = ssub.s32 1, %s3
  %s6 = scalar_select 0, %s5, %s3
  $region1: #{tpu_custom_call.1} parent=0
    #allocation2 [shape = 'u8[8192]{0}', space=vmem, size = 0x2000, scoped, tag = 'input window, operand 0, single buffered']
    #allocation3 [shape = 's32[1]{0}', space=sflag, size = 0x4, scoped, tag = 'scoped memory for tpu_custom_call.1']
    #allocation4 [shape = 's32[1]{0}', space=sflag, size = 0x4, scoped, tag = 'scoped memory for tpu_custom_call.1']
    #allocation5 [shape = 'u8[8192]{0}', space=vmem, size = 0x2000, scoped, tag = 'output window, operand 0, single buffered']
    %7 = vsyncpa [#allocation3], 0
    %8 = vsyncpa [#allocation4], 0
    // Predicated region
    $region2: #{tpu_custom_call.1} parent=1 // pred_check
      _
    $region3: #{tpu_custom_call.1} parent=1 // pred_check_branch
      %10 = sbr.rel (0) target = $region5
    $region4: #{tpu_custom_call.1} parent=1 // pred_region
      %s12 = ssub.s32 256, 256
      %13 = vsyncadd [#allocation3], %s12
      %s15 = sshll.u32 [#allocation2], 4
      %s16 = int_to_ptr.vmem [resolvable:$true] %s15
      %18 = dma.hbm_to_vmem [thread:$0]  %s0, 256, %s16, [#allocation3]
    $region5: #{tpu_custom_call.1} parent=1 // pred_fallthru
      _
    // Predicated region
    $region6: #{tpu_custom_call.1} parent=1 // pred_check
      _
    $region7: #{tpu_custom_call.1} parent=1 // pred_check_branch
      %20 = sbr.rel (0) target = $region9
    $region8: #{tpu_custom_call.1} parent=1 // pred_region
      _
    $region9: #{tpu_custom_call.1} parent=1 // pred_fallthru
      _
    // Predicated region
    $region10: #{tpu_custom_call.1} parent=1 // pred_check
      _
    $region11: #{tpu_custom_call.1} parent=1 // pred_check_branch
      %22 = sbr.rel (0) target = $region13
    $region12: #{tpu_custom_call.1} parent=1 // pred_region
      %23 = dma.done [#allocation3], 256
    $region13: #{tpu_custom_call.1} parent=1 // pred_fallthru
      _
    %v24 = vld [vmem:[#allocation2] sm:$0xff]
    %v25 = vld [vmem:[#allocation2 + $0x8] sm:$0xff]
    %v26 = vld [vmem:[%s1] sm:$0xff]
    %28 = vset.pattern.permute.xlu0 0
    %29 = vperm.xlu0 %28, %v26
    %v30 = vpop.permute.xlu0 %29
    %v32 = vadd.f32 %v24, %v30
    %v33 = vadd.f32 %v25, %v30
    %34 = vst [vmem:[#allocation5] sm:$0xff] %v32
    %35 = vst [vmem:[#allocation5 + $0x8] sm:$0xff] %v33
    // Predicated region
    $region14: #{tpu_custom_call.1} parent=1 // pred_check
      _
    $region15: #{tpu_custom_call.1} parent=1 // pred_check_branch
      %37 = sbr.rel (0) target = $region17
    $region16: #{tpu_custom_call.1} parent=1 // pred_region
      %s39 = ssub.s32 256, 256
      %40 = vsyncadd [#allocation4], %s39
      %s42 = sshll.u32 [#allocation5], 4
      %s43 = int_to_ptr.vmem [resolvable:$true] %s42
      %45 = dma.vmem_to_hbm [thread:$0]  %s43, 256, %s2, [#allocation4]
    $region17: #{tpu_custom_call.1} parent=1 // pred_fallthru
      _
    // Predicated region
    $region18: #{tpu_custom_call.1} parent=1 // pred_check
      _
    $region19: #{tpu_custom_call.1} parent=1 // pred_check_branch
      %47 = sbr.rel (0) target = $region21
    $region20: #{tpu_custom_call.1} parent=1 // pred_region
      %48 = dma.done [#allocation4], 256
    $region21: #{tpu_custom_call.1} parent=1 // pred_fallthru
      _
    %49 = vsyncpa [#allocation3], 1
    %50 = vsyncpa [#allocation4], 1

</llo_original>
